<compile_context>
chip_gen: v7x
topology: tpu7x:2x2x1
jax: 0.10.0
libtpu: 0.0.40
codegen_flags: <defaults>
</compile_context>

<pallas_src>
import functools

import jax
import jax.numpy as jnp
from jax.experimental import pallas as pl
from jax.experimental.pallas import tpu as pltpu

_LANES = 128           # lane width; output column padding target
_MAX_BLOCK_ROWS = 512  # weights are tiny (~50 KB padded); big row tiles fit VMEM everywhere


# ----------------------------- helpers ------------------------------------- #

def _round_up(n, m):
    return ((n + m - 1) // m) * m


def _pad_cols(a, cols):
    pad = cols - a.shape[-1]
    return a if pad == 0 else jnp.pad(a, ((0, 0), (0, pad)))


# ----------------------------- kernels ------------------------------------- #

def _continuous_kernel(A, x_ref, w1_ref, b1_ref, wh_ref, bh_ref, out_ref):
    """Fused fc1 + packed [mean | log_std | zero-pad] heads.

    Packed output columns: [tanh(mean) (A) | min(log_std, 1) (A) | pad].
    """
    h = jnp.dot(x_ref[...], w1_ref[...],
                preferred_element_type=jnp.float32) + b1_ref[...]
    y = jnp.dot(h, wh_ref[...],
                preferred_element_type=jnp.float32) + bh_ref[...]          # (TM, Np)
    col = jax.lax.broadcasted_iota(jnp.int32, y.shape, 1)
    # cols [0, A): tanh(mean); cols [A, ...): min(., 1)  (pad cols -> min(0,1)=0, sliced off)
    out_ref[...] = jnp.where(col < A, jnp.tanh(y), jnp.minimum(y, jnp.float32(1.0)))


def _discrete_kernel(A, x_ref, w1_ref, b1_ref, wp_ref, bp_ref, out_ref):
    """Fused fc1 + softmax(action_prob head) over the first A (real) columns."""
    h = jnp.dot(x_ref[...], w1_ref[...],
                preferred_element_type=jnp.float32) + b1_ref[...]
    logits = jnp.dot(h, wp_ref[...],
                     preferred_element_type=jnp.float32) + bp_ref[...]     # (TM, Np)
    col = jax.lax.broadcasted_iota(jnp.int32, logits.shape, 1)
    valid = col < A
    masked = jnp.where(valid, logits, -jnp.inf)
    m = jnp.max(masked, axis=-1, keepdims=True)
    e = jnp.exp(masked - m)                   # pad columns -> exp(-inf) == 0
    s = jnp.sum(e, axis=-1, keepdims=True)
    out_ref[...] = e * pl.reciprocal(s, approx=False)


def _all_heads_kernel(A, x_ref, w1_ref, b1_ref, wh_ref, bh_ref, out_ref):
    """One launch, fc1 computed once, all three heads in one (fc1, Np>=3A) matmul.

    Packed output columns: [tanh(mean) | min(log_std,1) | softmax(probs) | pad].
    """
    h = jnp.dot(x_ref[...], w1_ref[...],
                preferred_element_type=jnp.float32) + b1_ref[...]
    y = jnp.dot(h, wh_ref[...],
                preferred_element_type=jnp.float32) + bh_ref[...]          # (TM, Np)
    col = jax.lax.broadcasted_iota(jnp.int32, y.shape, 1)
    is_prob = (col >= 2 * A) & (col < 3 * A)
    # masked (prob-columns-only) numerically-stable softmax
    masked = jnp.where(is_prob, y, -jnp.inf)
    m = jnp.max(masked, axis=-1, keepdims=True)
    e = jnp.exp(masked - m)                   # non-prob / pad columns -> 0
    s = jnp.sum(e, axis=-1, keepdims=True)
    probs = e * pl.reciprocal(s, approx=False)
    out_ref[...] = jnp.where(col < A, jnp.tanh(y),
                             jnp.where(is_prob, probs,
                                       jnp.minimum(y, jnp.float32(1.0))))


# ----------------------------- wrappers ------------------------------------ #

def _batch_tiled_call(kernel, x, consts, out_cols, block_rows=None):
    """Run `kernel` over a batch-tiled 'parallel' grid; weights replicated per tile.

    The packed output is allocated with a lane-padded width (multiple of 128) so the
    kernel emits unmasked full-lane stores; the wrapper slices back to `out_cols`.
    """
    B, D = x.shape
    Np = _round_up(out_cols, _LANES)
    if block_rows is None:
        block_rows = min(_MAX_BLOCK_ROWS, _round_up(B, 8))
    TM = _round_up(block_rows, 8)                  # sublane-aligned row tile
    Bp = _round_up(B, TM)
    xp = jnp.pad(x, ((0, Bp - B), (0, 0))) if Bp != B else x

    in_specs = [pl.BlockSpec((TM, D), lambda i: (i, 0))]
    in_specs += [pl.BlockSpec(c.shape, lambda i, n=c.ndim: (0,) * n) for c in consts]

    out = pl.pallas_call(
        kernel,
        out_shape=jax.ShapeDtypeStruct((Bp, Np), jnp.float32),
        grid=(Bp // TM,),
        in_specs=in_specs,
        out_specs=pl.BlockSpec((TM, Np), lambda i: (i, 0)),
        compiler_params=pltpu.CompilerParams(
            dimension_semantics=("parallel",)),     # shards batch tiles across v7x's 2 TCs
    )(xp, *consts)
    return out[:B, :out_cols]


def actor_forward_continuous(x, params, *, block_rows=None):
    """is_continuous=True path: returns (action_mean, action_log_std)."""
    A = params["wm"].shape[1]
    Np = _round_up(2 * A, _LANES)
    # Head fusion: one (fc1, Np) matmul instead of two (fc1, A) ones.  In a training loop
    # the packed/padded weights can be kept pre-built; rebuilt here for self-containment.
    wh = _pad_cols(jnp.concatenate([params["wm"], params["ws"]], axis=1), Np)
    bh = _pad_cols(jnp.concatenate([params["bm"], params["bs"]], axis=1), Np)
    packed = _batch_tiled_call(functools.partial(_continuous_kernel, A), x,
                               (params["w1"], params["b1"], wh, bh),
                               2 * A, block_rows)
    return packed[:, :A], packed[:, A:]


def actor_forward_discrete(x, params, *, block_rows=None):
    """is_continuous=False path: returns softmax action probabilities."""
    A = params["wp"].shape[1]
    Np = _round_up(A, _LANES)
    wp = _pad_cols(params["wp"], Np)
    bp = _pad_cols(params["bp"], Np)
    return _batch_tiled_call(functools.partial(_discrete_kernel, A), x,
                             (params["w1"], params["b1"], wp, bp),
                             A, block_rows)


def actor_forward_both(x, params, *, block_rows=None):
    """Single pallas_call producing (mean, log_std, probs) — fc1 computed once."""
    A = params["wm"].shape[1]
    Np = _round_up(3 * A, _LANES)
    wh = _pad_cols(jnp.concatenate([params["wm"], params["ws"], params["wp"]], axis=1), Np)
    bh = _pad_cols(jnp.concatenate([params["bm"], params["bs"], params["bp"]], axis=1), Np)
    packed = _batch_tiled_call(functools.partial(_all_heads_kernel, A), x,
                               (params["w1"], params["b1"], wh, bh),
                               3 * A, block_rows)
    return packed[:, :A], packed[:, A:2 * A], packed[:, 2 * A:3 * A]


# ----------------------- deterministic param init -------------------------- #

def _torch_linear_init(key, in_dim, out_dim):
    # Mimic torch.nn.Linear default init: U(-1/sqrt(in), 1/sqrt(in)).
    k = 1.0 / jnp.sqrt(jnp.float32(in_dim))
    kw, kb = jax.random.split(key)
    w = jax.random.uniform(kw, (in_dim, out_dim), jnp.float32, -k, k)  # stored (in, out)
    b = jax.random.uniform(kb, (1, out_dim), jnp.float32, -k, k)
    return w, b


def make_params(key, extracted_feature_dim, fc1_dim, action_dim):
    k1, k2, k3, k4 = jax.random.split(key, 4)
    w1, b1 = _torch_linear_init(k1, extracted_feature_dim, fc1_dim)
    wm, bm = _torch_linear_init(k2, fc1_dim, action_dim)   # action_mean
    ws, bs = _torch_linear_init(k3, fc1_dim, action_dim)   # action_log_std
    wp, bp = _torch_linear_init(k4, fc1_dim, action_dim)   # action_prob
    return dict(w1=w1, b1=b1, wm=wm, bm=bm, ws=ws, bs=bs, wp=wp, bp=bp)


# ----------------------------- reference ----------------------------------- #

def ref_continuous(x, p):
    h = x @ p["w1"] + p["b1"]
    mean = jnp.tanh(h @ p["wm"] + p["bm"])
    log_std = jnp.minimum(h @ p["ws"] + p["bs"], 1.0)   # clamp(., -inf, 1)
    return mean, log_std


def ref_discrete(x, p):
    h = x @ p["w1"] + p["b1"]
    return jax.nn.softmax(h @ p["wp"] + p["bp"], axis=-1)


def _check(a, b, msg):
    assert jnp.allclose(a, b, atol=1e-5, rtol=1e-5), msg


# ------------------------------- main -------------------------------------- #

if __name__ == "__main__":
    extracted_feature_dim = 32
    fc1_dim = 64
    action_dim = 4

    root = jax.random.PRNGKey(0)
    kx, kp = jax.random.split(root)
    params = make_params(kp, extracted_feature_dim, fc1_dim, action_dim)

    # --- small / ragged batch (13 rows -> padded to a single 16-row tile) ---
    x_small = jax.random.normal(kx, (13, extracted_feature_dim), jnp.float32)

    mean, log_std = actor_forward_continuous(x_small, params)
    jax.block_until_ready((mean, log_std))
    mean_r, log_std_r = ref_continuous(x_small, params)
    _check(mean, mean_r, "continuous mean mismatch (small batch)")
    _check(log_std, log_std_r, "continuous log_std mismatch (small batch)")

    probs = actor_forward_discrete(x_small, params)
    jax.block_until_ready(probs)
    _check(probs, ref_discrete(x_small, params), "discrete softmax mismatch (small batch)")

    # --- multi-tile batch grid path (24 rows, 8-row tiles -> grid=(3,), parallel) ---
    x_big = jax.random.normal(jax.random.fold_in(kx, 1),
                              (24, extracted_feature_dim), jnp.float32)

    mean2, log_std2 = actor_forward_continuous(x_big, params, block_rows=8)
    probs2 = actor_forward_discrete(x_big, params, block_rows=8)
    jax.block_until_ready((mean2, log_std2, probs2))
    mean2_r, log_std2_r = ref_continuous(x_big, params)
    _check(mean2, mean2_r, "continuous mean mismatch (tiled batch)")
    _check(log_std2, log_std2_r, "continuous log_std mismatch (tiled batch)")
    _check(probs2, ref_discrete(x_big, params), "discrete softmax mismatch (tiled batch)")

    # --- fused single-launch path: fc1 computed once, all three heads together ---
    mean3, log_std3, probs3 = actor_forward_both(x_small, params)
    jax.block_until_ready((mean3, log_std3, probs3))
    _check(mean3, mean_r, "combined mean mismatch")
    _check(log_std3, log_std_r, "combined log_std mismatch")
    _check(probs3, ref_discrete(x_small, params), "combined softmax mismatch")

    print("KERNEL_OK")
</pallas_src>

<mosaic_0001>
module attributes {stable_mosaic.version = 11 : i64} {
  func.func @_continuous_kernel(%arg0: i32, %arg1: memref<16x32xf32, #tpu.memory_space<vmem>>, %arg2: memref<32x64xf32, #tpu.memory_space<vmem>>, %arg3: memref<1x64xf32, #tpu.memory_space<vmem>>, %arg4: memref<64x128xf32, #tpu.memory_space<vmem>>, %arg5: memref<1x128xf32, #tpu.memory_space<vmem>>, %arg6: memref<16x128xf32, #tpu.memory_space<vmem>>) attributes {dimension_semantics = [#tpu.dimension_semantics<parallel>], iteration_bounds = array<i64: 1>, scalar_prefetch = 0 : i64, scratch_operands = 0 : i64, tpu.core_type = #tpu.core_type<tc>, window_params = [{transform_indices = @transform_0, window_bounds = array<i64: 16, 32>}, {pipeline_mode = #tpu.pipeline_mode<synchronous>, transform_indices = @transform_1, window_bounds = array<i64: 32, 64>}, {pipeline_mode = #tpu.pipeline_mode<synchronous>, transform_indices = @transform_2, window_bounds = array<i64: 1, 64>}, {pipeline_mode = #tpu.pipeline_mode<synchronous>, transform_indices = @transform_3, window_bounds = array<i64: 64, 128>}, {pipeline_mode = #tpu.pipeline_mode<synchronous>, transform_indices = @transform_4, window_bounds = array<i64: 1, 128>}, {transform_indices = @transform_5, window_bounds = array<i64: 16, 128>}]} {
    %c0 = arith.constant 0 : index
    %c0_0 = arith.constant 0 : index
    %0 = vector.load %arg1[%c0, %c0_0] : memref<16x32xf32, #tpu.memory_space<vmem>>, vector<16x32xf32>
    %c0_1 = arith.constant 0 : index
    %c0_2 = arith.constant 0 : index
    %1 = vector.load %arg2[%c0_1, %c0_2] : memref<32x64xf32, #tpu.memory_space<vmem>>, vector<32x64xf32>
    %cst = arith.constant dense<0.000000e+00> : vector<16x64xf32>
    %2 = tpu.matmul %0, %1, %cst {dimension_numbers = #tpu.dot_dimension_numbers<[1], [0], [0], [1], [0, 0, 1, 1], [], []>} : vector<16x32xf32>, vector<32x64xf32>, vector<16x64xf32> -> vector<16x64xf32>
    %c0_3 = arith.constant 0 : index
    %c0_4 = arith.constant 0 : index
    %3 = vector.load %arg3[%c0_3, %c0_4] : memref<1x64xf32, #tpu.memory_space<vmem>>, vector<1x64xf32>
    %4 = vector.broadcast %3 : vector<1x64xf32> to vector<16x64xf32>
    %5 = arith.addf %2, %4 : vector<16x64xf32>
    %c0_5 = arith.constant 0 : index
    %c0_6 = arith.constant 0 : index
    %6 = vector.load %arg4[%c0_5, %c0_6] : memref<64x128xf32, #tpu.memory_space<vmem>>, vector<64x128xf32>
    %cst_7 = arith.constant dense<0.000000e+00> : vector<16x128xf32>
    %7 = tpu.matmul %5, %6, %cst_7 {dimension_numbers = #tpu.dot_dimension_numbers<[1], [0], [0], [1], [0, 0, 1, 1], [], []>} : vector<16x64xf32>, vector<64x128xf32>, vector<16x128xf32> -> vector<16x128xf32>
    %c0_8 = arith.constant 0 : index
    %c0_9 = arith.constant 0 : index
    %8 = vector.load %arg5[%c0_8, %c0_9] : memref<1x128xf32, #tpu.memory_space<vmem>>, vector<1x128xf32>
    %9 = vector.broadcast %8 : vector<1x128xf32> to vector<16x128xf32>
    %10 = arith.addf %7, %9 : vector<16x128xf32>
    %11 = tpu.iota {dimensions = array<i32: 1>} : vector<16x128xi32>
    %c4_i32 = arith.constant 4 : i32
    %12 = vector.broadcast %c4_i32 : i32 to vector<16x128xi32>
    %13 = arith.cmpi slt, %11, %12 : vector<16x128xi32>
    %14 = math.tanh %10 : vector<16x128xf32>
    %cst_10 = arith.constant 1.000000e+00 : f32
    %15 = vector.broadcast %cst_10 : f32 to vector<16x128xf32>
    %16 = arith.minimumf %10, %15 : vector<16x128xf32>
    %17 = arith.select %13, %14, %16 : vector<16x128xi1>, vector<16x128xf32>
    %c0_11 = arith.constant 0 : index
    %c0_12 = arith.constant 0 : index
    %18 = vector.load %arg6[%c0_11, %c0_12] : memref<16x128xf32, #tpu.memory_space<vmem>>, vector<16x128xf32>
    tpu.vector_store %arg6[%c0_11, %c0_12], %17 {strides = array<i32>} : memref<16x128xf32, #tpu.memory_space<vmem>>, vector<16x128xf32>,
    return
  }
  func.func @transform_0(%arg0: i32) -> (i32, i32) {
    %c0_i32 = arith.constant 0 : i32
    %c0_i32_0 = arith.constant 0 : i32
    return %arg0, %c0_i32 : i32, i32
  }
  func.func @transform_1(%arg0: i32) -> (i32, i32) {
    %c0_i32 = arith.constant 0 : i32
    %c0_i32_0 = arith.constant 0 : i32
    %c0_i32_1 = arith.constant 0 : i32
    return %c0_i32, %c0_i32_0 : i32, i32
  }
  func.func @transform_2(%arg0: i32) -> (i32, i32) {
    %c0_i32 = arith.constant 0 : i32
    %c0_i32_0 = arith.constant 0 : i32
    %c0_i32_1 = arith.constant 0 : i32
    return %c0_i32, %c0_i32_0 : i32, i32
  }
  func.func @transform_3(%arg0: i32) -> (i32, i32) {
    %c0_i32 = arith.constant 0 : i32
    %c0_i32_0 = arith.constant 0 : i32
    %c0_i32_1 = arith.constant 0 : i32
    return %c0_i32, %c0_i32_0 : i32, i32
  }
  func.func @transform_4(%arg0: i32) -> (i32, i32) {
    %c0_i32 = arith.constant 0 : i32
    %c0_i32_0 = arith.constant 0 : i32
    %c0_i32_1 = arith.constant 0 : i32
    return %c0_i32, %c0_i32_0 : i32, i32
  }
  func.func @transform_5(%arg0: i32) -> (i32, i32) {
    %c0_i32 = arith.constant 0 : i32
    %c0_i32_0 = arith.constant 0 : i32
    return %arg0, %c0_i32 : i32, i32
  }
}

</mosaic_0001>

<llo_original>
// kernel: tpu_custom_call.1
$region0: #{tpu_custom_call.1}
  #allocation0 [shape = 'u32[]', space=smem, size = 0x4, offset = 0x4, fixed_abs, tag = 'smem constant byte address 0x4 - core index']
  #allocation1 [shape = 'u32[144,128]{1,0:T(1,128)}', space=vmem, size = 0x12000, scoped, tag = 'internal scratch']
  %s0 = inlined_call_operand.hbm [shape: f32[16,32], index: 0, kind: input, shape index: {}]
  %s1 = inlined_call_operand.hbm [shape: f32[32,64], index: 1, kind: input, shape index: {}]
  %s2 = inlined_call_operand.vmem [shape: f32[1,64], index: 2, kind: input, shape index: {}]
  %s3 = inlined_call_operand.hbm [shape: f32[64,128], index: 3, kind: input, shape index: {}]
  %s4 = inlined_call_operand.vmem [shape: f32[1,128], index: 4, kind: input, shape index: {}]
  %s5 = inlined_call_operand.hbm [shape: f32[16,128], index: 5, kind: output, shape index: {}]
  %s6 = sld [smem:[#allocation0]]
  $region42: #{tpu_custom_call.1} parent=0
    _
  %s8 = ssub.s32 1, %s6
  %s9 = scalar_select 0, %s8, %s6
  $region1: #{tpu_custom_call.1} parent=0
    #allocation2 [shape = 'u8[8192]{0}', space=vmem, size = 0x2000, scoped, tag = 'input window, operand 0, single buffered']
    #allocation3 [shape = 's32[1]{0}', space=sflag, size = 0x4, scoped, tag = 'scoped memory for tpu_custom_call.1']
    #allocation4 [shape = 's32[1]{0}', space=sflag, size = 0x4, scoped, tag = 'scoped memory for tpu_custom_call.1']
    #allocation5 [shape = 'u8[16384]{0}', space=vmem, size = 0x4000, scoped, tag = 'input window, operand 1, single buffered']
    #allocation6 [shape = 's32[1]{0}', space=sflag, size = 0x4, scoped, tag = 'scoped memory for tpu_custom_call.1']
    #allocation7 [shape = 'u8[32768]{0}', space=vmem, size = 0x8000, scoped, tag = 'input window, operand 3, single buffered']
    #allocation8 [shape = 'u8[8192]{0}', space=vmem, size = 0x2000, scoped, tag = 'output window, operand 0, single buffered']
    %10 = vsyncpa [#allocation3], 0
    %11 = vsyncpa [#allocation6], 0
    %12 = vsyncpa [#allocation4], 0
    // Predicated region
    $region2: #{tpu_custom_call.1} parent=1 // pred_check
      _
    $region3: #{tpu_custom_call.1} parent=1 // pred_check_branch
      %14 = sbr.rel (0) target = $region5
    $region4: #{tpu_custom_call.1} parent=1 // pred_region
      %s16 = ssub.s32 256, 256
      %17 = vsyncadd [#allocation3], %s16
      %s18 = sshll.u32 [#allocation2], 4
      %s19 = int_to_ptr.vmem [resolvable:$true] %s18
      %24 = dma.hbm_to_vmem [thread:$0]  %s0, 256, %s19, [#allocation3], 128, 128, 8
    $region5: #{tpu_custom_call.1} parent=1 // pred_fallthru
      _
    // Predicated region
    $region6: #{tpu_custom_call.1} parent=1 // pred_check
      _
    $region7: #{tpu_custom_call.1} parent=1 // pred_check_branch
      %26 = sbr.rel (0) target = $region9
    $region8: #{tpu_custom_call.1} parent=1 // pred_region
      %s28 = ssub.s32 512, 512
      %29 = vsyncadd [#allocation6], %s28
      %s30 = sshll.u32 [#allocation5], 4
      %s31 = int_to_ptr.vmem [resolvable:$true] %s30
      %36 = dma.hbm_to_vmem [thread:$0]  %s1, 512, %s31, [#allocation6], 128, 128, 8
    $region9: #{tpu_custom_call.1} parent=1 // pred_fallthru
      _
    // Predicated region
    $region10: #{tpu_custom_call.1} parent=1 // pred_check
      _
    $region11: #{tpu_custom_call.1} parent=1 // pred_check_branch
      %38 = sbr.rel (0) target = $region13
    $region12: #{tpu_custom_call.1} parent=1 // pred_region
      _
    $region13: #{tpu_custom_call.1} parent=1 // pred_fallthru
      _
    // Predicated region
    $region14: #{tpu_custom_call.1} parent=1 // pred_check
      _
    $region15: #{tpu_custom_call.1} parent=1 // pred_check_branch
      %40 = sbr.rel (0) target = $region17
    $region16: #{tpu_custom_call.1} parent=1 // pred_region
      %s42 = ssub.s32 1024, 1024
      %43 = vsyncadd [#allocation6], %s42
      %s44 = sshll.u32 [#allocation7], 4
      %s45 = int_to_ptr.vmem [resolvable:$true] %s44
      %50 = dma.hbm_to_vmem [thread:$0]  %s3, 1024, %s45, [#allocation6], 128, 128, 8
    $region17: #{tpu_custom_call.1} parent=1 // pred_fallthru
      _
    // Predicated region
    $region18: #{tpu_custom_call.1} parent=1 // pred_check
      _
    $region19: #{tpu_custom_call.1} parent=1 // pred_check_branch
      %52 = sbr.rel (0) target = $region21
    $region20: #{tpu_custom_call.1} parent=1 // pred_region
      _
    $region21: #{tpu_custom_call.1} parent=1 // pred_fallthru
      _
    // Predicated region
    $region22: #{tpu_custom_call.1} parent=1 // pred_check
      _
    $region23: #{tpu_custom_call.1} parent=1 // pred_check_branch
      %54 = sbr.rel (0) target = $region25
    $region24: #{tpu_custom_call.1} parent=1 // pred_region
      %55 = dma.done [#allocation3], 256
    $region25: #{tpu_custom_call.1} parent=1 // pred_fallthru
      _
    // Predicated region
    $region26: #{tpu_custom_call.1} parent=1 // pred_check
      _
    $region27: #{tpu_custom_call.1} parent=1 // pred_check_branch
      %57 = sbr.rel (0) target = $region29
    $region28: #{tpu_custom_call.1} parent=1 // pred_region
      %58 = dma.done [#allocation6], 512
    $region29: #{tpu_custom_call.1} parent=1 // pred_fallthru
      _
    // Predicated region
    $region30: #{tpu_custom_call.1} parent=1 // pred_check
      _
    $region31: #{tpu_custom_call.1} parent=1 // pred_check_branch
      %60 = sbr.rel (0) target = $region33
    $region32: #{tpu_custom_call.1} parent=1 // pred_region
      %61 = dma.done [#allocation6], 1024
    $region33: #{tpu_custom_call.1} parent=1 // pred_fallthru
      _
    %v62 = vld [vmem:[#allocation2] sm:$0xff]
    %v63 = vld [vmem:[#allocation2 + $0x8] sm:$0xff]
    %v64 = vld [vmem:[#allocation5] sm:$0xff]
    %v65 = vld [vmem:[#allocation5 + $0x8] sm:$0xff]
    %v66 = vld [vmem:[#allocation5 + $0x10] sm:$0xff]
    %v67 = vld [vmem:[#allocation5 + $0x18] sm:$0xff]
    %v68 = vld [vmem:[%s2] sm:$0x1]
    %v70 = vlaneseq
    %v71 = vshrl.u32 %v70, 7
    %v72 = vsub.s32 0, %v71
    %v73 = vrot.slane %v68, %v72
    %vm75 = vcmask 261120
    %v77 = vsel %vm75, %v62, 0
    %v80 = vsel %vm75, %v63, 0
    %82 = vmatprep.subr.mxu0 0.0
    %83 = vmatpush1.msra.mxu0 %v64
    %84 = vmatprep.subr.mxu0 0.0
    %85 = vmatpush1.msra.mxu0 %v65
    %86 = vmatprep.subr.mxu0 0.0
    %87 = vmatpush1.msra.mxu0 %v66
    %88 = vmatprep.subr.mxu0 0.0
    %89 = vmatpush1.msra.mxu0 %v67
    %90 = vmatprep.subr.mxu0 0.0
    %91 = vmatpush1.msra.mxu0 0.0
    %92 = vmatprep.subr.mxu0 0.0
    %93 = vmatpush1.msra.mxu0 0.0
    %94 = vmatprep.subr.mxu0 0.0
    %95 = vmatpush1.msra.mxu0 0.0
    %96 = vmatprep.subr.mxu0 0.0
    %97 = vmatpush1.msra.mxu0 0.0
    %98 = vmatprep.subr.mxu0 0.0
    %99 = vmatpush1.msra.mxu0 0.0
    %100 = vmatprep.subr.mxu0 0.0
    %101 = vmatpush1.msra.mxu0 0.0
    %102 = vmatprep.subr.mxu0 0.0
    %103 = vmatpush1.msra.mxu0 0.0
    %104 = vmatprep.subr.mxu0 0.0
    %105 = vmatpush1.msra.mxu0 0.0
    %106 = vmatprep.subr.mxu0 0.0
    %107 = vmatpush1.msra.mxu0 0.0
    %108 = vmatprep.subr.mxu0 0.0
    %109 = vmatpush1.msra.mxu0 0.0
    %110 = vmatprep.subr.mxu0 0.0
    %111 = vmatpush1.msra.mxu0 0.0
    %112 = vmatprep.subr.mxu0 0.0
    %113 = vmatpush1.msra.mxu0 0.0
    %114 = vmatprep.subr.mxu0 0.0
    %115 = vmatpush1.msra.mxu0 0.0
    %116 = vmatprep.subr.mxu0 0.0
    %117 = vmatpush1.msra.mxu0 0.0
    %118 = vmatprep.subr.mxu0 0.0
    %119 = vmatpush1.msra.mxu0 0.0
    %120 = vmatprep.subr.mxu0 0.0
    %121 = vmatpush1.msra.mxu0 0.0
    %122 = vmatprep.subr.mxu0 0.0
    %123 = vmatpush1.msra.mxu0 0.0
    %124 = vmatprep.subr.mxu0 0.0
    %125 = vmatpush1.msra.mxu0 0.0
    %126 = vmatprep.subr.mxu0 0.0
    %127 = vmatpush1.msra.mxu0 0.0
    %128 = vmatprep.subr.mxu0 0.0
    %129 = vmatpush1.msra.mxu0 0.0
    %130 = vmatprep.subr.mxu0 0.0
    %131 = vmatpush1.msra.mxu0 0.0
    %132 = vmatprep.subr.mxu0 0.0
    %133 = vmatpush1.msra.mxu0 0.0
    %134 = vmatprep.subr.mxu0 0.0
    %135 = vmatpush1.msra.mxu0 0.0
    %136 = vmatprep.subr.mxu0 0.0
    %137 = vmatpush1.msra.mxu0 0.0
    %138 = vmatprep.subr.mxu0 0.0
    %139 = vmatpush1.msra.mxu0 0.0
    %140 = vmatprep.subr.mxu0 0.0
    %141 = vmatpush1.msra.mxu0 0.0
    %142 = vmatprep.subr.mxu0 0.0
    %143 = vmatpush1.msra.mxu0 0.0
    %144 = vmatprep.subr.mxu0 0.0
    %145 = vmatpush1.msra.mxu0 0.0
    %146 = vmatprep.mubr.f32.mxu0 0.0
    %147 = vmatmul.mubr.f32.gmra.mrb[0].mxu0 %v77
    %v148 = vpop.f32.mrb[0].mxu0
    %v149 = vadd.f32 %v73, %v148
    %v150 = vpop.f32.mrb[0].mxu0
    %151 = vmatprep.mubr.f32.mxu0 0.0
    %152 = vmatmul.mubr.f32.gmra.mrb[0].mxu0 %v80
    %v153 = vpop.f32.mrb[0].mxu0
    %v154 = vadd.f32 %v73, %v153
    %v155 = vpop.f32.mrb[0].mxu0
    %156 = vdwg.mxu0
    %v157 = vld [vmem:[#allocation7] sm:$0xff]
    %v158 = vld [vmem:[#allocation7 + $0x8] sm:$0xff]
    %v159 = vld [vmem:[#allocation7 + $0x10] sm:$0xff]
    %v160 = vld [vmem:[#allocation7 + $0x18] sm:$0xff]
    %v161 = vld [vmem:[#allocation7 + $0x20] sm:$0xff]
    %v162 = vld [vmem:[#allocation7 + $0x28] sm:$0xff]
    %v163 = vld [vmem:[#allocation7 + $0x30] sm:$0xff]
    %v164 = vld [vmem:[#allocation7 + $0x38] sm:$0xff]
    %v165 = vld [vmem:[%s4] sm:$0x1]
    %v167 = vlaneseq
    %v168 = vshrl.u32 %v167, 7
    %v169 = vsub.s32 0, %v168
    %v170 = vrot.slane %v165, %v169
    %vm172 = vcmask 523264
    %v174 = vsel %vm172, %v149, 0
    %v177 = vsel %vm172, %v154, 0
    %179 = vmatprep.subr.mxu0 0.0
    %180 = vmatpush1.msra.mxu0 %v157
    %181 = vmatprep.subr.mxu0 0.0
    %182 = vmatpush1.msra.mxu0 %v158
    %183 = vmatprep.subr.mxu0 0.0
    %184 = vmatpush1.msra.mxu0 %v159
    %185 = vmatprep.subr.mxu0 0.0
    %186 = vmatpush1.msra.mxu0 %v160
    %187 = vmatprep.subr.mxu0 0.0
    %188 = vmatpush1.msra.mxu0 %v161
    %189 = vmatprep.subr.mxu0 0.0
    %190 = vmatpush1.msra.mxu0 %v162
    %191 = vmatprep.subr.mxu0 0.0
    %192 = vmatpush1.msra.mxu0 %v163
    %193 = vmatprep.subr.mxu0 0.0
    %194 = vmatpush1.msra.mxu0 %v164
    %195 = vmatprep.subr.mxu0 0.0
    %196 = vmatpush1.msra.mxu0 0.0
    %197 = vmatprep.subr.mxu0 0.0
    %198 = vmatpush1.msra.mxu0 0.0
    %199 = vmatprep.subr.mxu0 0.0
    %200 = vmatpush1.msra.mxu0 0.0
    %201 = vmatprep.subr.mxu0 0.0
    %202 = vmatpush1.msra.mxu0 0.0
    %203 = vmatprep.subr.mxu0 0.0
    %204 = vmatpush1.msra.mxu0 0.0
    %205 = vmatprep.subr.mxu0 0.0
    %206 = vmatpush1.msra.mxu0 0.0
    %207 = vmatprep.subr.mxu0 0.0
    %208 = vmatpush1.msra.mxu0 0.0
    %209 = vmatprep.subr.mxu0 0.0
    %210 = vmatpush1.msra.mxu0 0.0
    %211 = vmatprep.subr.mxu0 0.0
    %212 = vmatpush1.msra.mxu0 0.0
    %213 = vmatprep.subr.mxu0 0.0
    %214 = vmatpush1.msra.mxu0 0.0
    %215 = vmatprep.subr.mxu0 0.0
    %216 = vmatpush1.msra.mxu0 0.0
    %217 = vmatprep.subr.mxu0 0.0
    %218 = vmatpush1.msra.mxu0 0.0
    %219 = vmatprep.subr.mxu0 0.0
    %220 = vmatpush1.msra.mxu0 0.0
    %221 = vmatprep.subr.mxu0 0.0
    %222 = vmatpush1.msra.mxu0 0.0
    %223 = vmatprep.subr.mxu0 0.0
    %224 = vmatpush1.msra.mxu0 0.0
    %225 = vmatprep.subr.mxu0 0.0
    %226 = vmatpush1.msra.mxu0 0.0
    %227 = vmatprep.subr.mxu0 0.0
    %228 = vmatpush1.msra.mxu0 0.0
    %229 = vmatprep.subr.mxu0 0.0
    %230 = vmatpush1.msra.mxu0 0.0
    %231 = vmatprep.subr.mxu0 0.0
    %232 = vmatpush1.msra.mxu0 0.0
    %233 = vmatprep.subr.mxu0 0.0
    %234 = vmatpush1.msra.mxu0 0.0
    %235 = vmatprep.subr.mxu0 0.0
    %236 = vmatpush1.msra.mxu0 0.0
    %237 = vmatprep.subr.mxu0 0.0
    %238 = vmatpush1.msra.mxu0 0.0
    %239 = vmatprep.subr.mxu0 0.0
    %240 = vmatpush1.msra.mxu0 0.0
    %241 = vmatprep.subr.mxu0 0.0
    %242 = vmatpush1.msra.mxu0 0.0
    %243 = vmatprep.mubr.f32.mxu0 0.0
    %244 = vmatmul.mubr.f32.gmra.mrb[0].mxu0 %v174
    %v245 = vpop.f32.mrb[0].mxu0
    %v246 = vadd.f32 %v170, %v245
    %v247 = vpop.f32.mrb[0].mxu0
    %248 = vmatprep.mubr.f32.mxu0 0.0
    %249 = vmatmul.mubr.f32.gmra.mrb[0].mxu0 %v177
    %v250 = vpop.f32.mrb[0].mxu0
    %v251 = vadd.f32 %v170, %v250
    %v252 = vpop.f32.mrb[0].mxu0
    %253 = vdwg.mxu0
    %v254 = vlaneseq
    %v255 = vand.u32 %v254, 127
    %vm256 = vcmp.lt.s32.totalorder %v255, 4
    %v257 = vtanh.pop %v246
    %v258 = vtanh.pop %v251
    %v259 = vmin.f32 %v246, 1.0
    %v260 = vmin.f32 %v251, 1.0
    %v261 = vsel %vm256, %v257, %v259
    %v262 = vsel %vm256, %v258, %v260
    %263 = vst [vmem:[#allocation8] sm:$0xff] %v261
    %264 = vst [vmem:[#allocation8 + $0x8] sm:$0xff] %v262
    // Predicated region
    $region34: #{tpu_custom_call.1} parent=1 // pred_check
      _
    $region35: #{tpu_custom_call.1} parent=1 // pred_check_branch
      %266 = sbr.rel (0) target = $region37
    $region36: #{tpu_custom_call.1} parent=1 // pred_region
      %s268 = ssub.s32 256, 256
      %269 = vsyncadd [#allocation4], %s268
      %s270 = sshll.u32 [#allocation8], 4
      %s271 = int_to_ptr.vmem [resolvable:$true] %s270
      %276 = dma.vmem_to_hbm [thread:$0]  %s271, 256, %s5, [#allocation4], 128, 128, 8
    $region37: #{tpu_custom_call.1} parent=1 // pred_fallthru
      _
    // Predicated region
    $region38: #{tpu_custom_call.1} parent=1 // pred_check
      _
    $region39: #{tpu_custom_call.1} parent=1 // pred_check_branch
      %278 = sbr.rel (0) target = $region41
    $region40: #{tpu_custom_call.1} parent=1 // pred_region
      %279 = dma.done [#allocation4], 256
    $region41: #{tpu_custom_call.1} parent=1 // pred_fallthru
      _
    %280 = vsyncpa [#allocation3], 1
    %281 = vsyncpa [#allocation6], 1
    %282 = vsyncpa [#allocation4], 1

</llo_original>
